<compile_context>
chip_gen: v5e
topology: v5e:2x2
jax: 0.10.0
libtpu: 0.0.40
codegen_flags: <defaults>
</compile_context>

<pallas_src>
import numpy as np

import jax
import jax.numpy as jnp
from jax.experimental import pallas as pl
from jax.experimental.pallas import tpu as pltpu


# --------------------------------------------------------------------------- #
# Kernel
# --------------------------------------------------------------------------- #
def _reorg_kernel(q_ref, x_ref, o_ref):
    """q_ref: (K, K) one-hot permutation (fused over i, j and the row fold).
    x_ref: (TB, TC*Mc, K)        folded input rows, lanes = (k, i, w)
    o_ref: (TB, s*s, TC*Mc, r*Wo) staged output planes
    """
    q = q_ref[...]
    tb_blk = x_ref.shape[0]
    planes = o_ref.shape[1]
    nb = o_ref.shape[3]
    for tb in range(tb_blk):
        xr = x_ref[tb].astype(q.dtype)
        # Exact one-hot selection on the MXU; f32 accumulation.
        res = jnp.dot(xr, q, preferred_element_type=jnp.float32)
        for p in range(planes):
            o_ref[tb, p] = res[:, p * nb:(p + 1) * nb].astype(o_ref.dtype)


# --------------------------------------------------------------------------- #
# Sizing helpers
# --------------------------------------------------------------------------- #
def _roundup(a, m):
    return ((a + m - 1) // m) * m


def _divisors(n):
    return [d for d in range(1, n + 1) if n % d == 0]


def _sublane(itemsize):
    return {4: 8, 2: 16, 1: 32}.get(itemsize, 8)


def _vmem_capacity_bytes():
    try:
        cap = getattr(pltpu.get_tpu_info(), "vmem_capacity_bytes", None)
        if cap:
            return int(cap)
    except Exception:
        pass
    return 64 * 1024 * 1024  # conservative (v7x per-TensorCore VMEM)


def _pick_row_fold(Ho, Wo, s, W, mm_itemsize, k_cap=1024, q_cap=4 << 20):
    """Fold r output rows (r | Ho) into the lane axis.

    Prefer the smallest r making the output lane dim r*Wo >= 128 (dense
    stores / big DMA rows); otherwise the densest r whose (K, K) selection
    matrix still fits the caps.
    """
    sub = _sublane(mm_itemsize)

    def q_bytes(r):
        k = r * s * W
        return _roundup(k, sub) * _roundup(k, 128) * mm_itemsize

    cands = [r for r in _divisors(Ho)
             if r * s * W <= k_cap and q_bytes(r) <= q_cap]
    if not cands:
        return 1
    dense = [r for r in cands if r * Wo >= 128]
    return min(dense) if dense else max(cands)


def _pick_blocks(B, C, Mc, K, planes, n_lanes, itemsize, mm_itemsize, budget):
    """Largest (TB, TC) divisor pair whose padded, double-buffered VMEM
    footprint fits `budget`, honoring the (8,128) BlockSpec constraint and
    keeping >= 2 grid programs when possible (v7x has 2 TensorCores)."""
    sub = _sublane(itemsize)
    lanes_in = _roundup(K, 128)
    lanes_out = _roundup(n_lanes, 128)
    lanes_res = _roundup(planes * n_lanes, 128)
    q_b = 2 * _roundup(K, _sublane(mm_itemsize)) * lanes_res * mm_itemsize

    def footprint(tb, tc):
        m_pad = _roundup(tc * Mc, sub)
        m_pad32 = _roundup(tc * Mc, 8)
        in_b = 2 * tb * m_pad * lanes_in * itemsize            # dbl-buffered in
        out_b = 2 * tb * planes * m_pad * lanes_out * itemsize  # dbl-buffered out
        tmp_b = 2 * (m_pad32 * lanes_res * 4                    # f32 result
                     + m_pad * lanes_in * mm_itemsize)          # cast copy
        return q_b + in_b + out_b + tmp_b

    # Second-to-last block dim must be a multiple of 8 or the full dim.
    valid_tc = [t for t in _divisors(C) if t == C or (t * Mc) % 8 == 0]
    fits = [t for t in valid_tc if footprint(1, t) <= budget]
    TC = max(fits) if fits else min(valid_tc)

    tb_fits = [t for t in _divisors(B) if footprint(t, TC) <= budget]
    TB = max(tb_fits) if tb_fits else 1

    while (B // TB) * (C // TC) < 2:
        if TB > 1:
            TB = max(d for d in _divisors(B) if d < TB)
        else:
            smaller = [t for t in valid_tc if t < TC]
            if not smaller:
                break
            TC = max(smaller)

    return TB, TC, footprint(TB, TC)


# --------------------------------------------------------------------------- #
# Wrapper
# --------------------------------------------------------------------------- #
def reorg_pallas(x, stride=2):
    assert x.ndim == 4
    B, C, H, W = x.shape
    s = int(stride)
    assert H % s == 0 and W % s == 0
    Ho, Wo = H // s, W // s

    if not jnp.issubdtype(x.dtype, jnp.floating):
        # TODO(synk): integer inputs would round-trip through the f32 MXU
        # (lossy above 2**24); use the exact XLA transpose path instead.
        return reorg_reference(x, stride=s)

    mm_dtype = (x.dtype if x.dtype in (jnp.dtype(jnp.float32),
                                       jnp.dtype(jnp.bfloat16))
                else jnp.dtype(jnp.float32))
    itemsize = jnp.dtype(x.dtype).itemsize
    mm_itemsize = jnp.dtype(mm_dtype).itemsize

    # Row fold for lane density.
    r = _pick_row_fold(Ho, Wo, s, W, mm_itemsize)
    Mc = Ho // r
    K = r * s * W              # input lanes per folded row (== N below)
    planes = s * s
    n_lanes = r * Wo           # output lanes per (i, j) plane
    N = planes * n_lanes       # == K (permutation matrix is square)

    # Generation-aware, padding-aware VMEM budget.
    capacity = _vmem_capacity_bytes()
    budget = int(0.45 * capacity)
    TB, TC, est_bytes = _pick_blocks(B, C, Mc, K, planes, n_lanes,
                                     itemsize, mm_itemsize, budget)
    vmem_limit = int(min(0.85 * capacity,
                         max(2 * est_bytes, 32 * 1024 * 1024)))

    # One-hot permutation matrix, built once on the host (zero device compute).
    # Column (i*s + j)*r*Wo + k*Wo + q selects input lane k*s*W + i*W + q*s + j.
    col = np.arange(N)
    ij = col // n_lanes
    i_, j_ = ij // s, ij % s
    rem = col % n_lanes
    k_, q_ = rem // Wo, rem % Wo
    src = k_ * (s * W) + i_ * W + q_ * s + j_
    q_np = np.zeros((K, N), dtype=np.float32)
    q_np[src, col] = 1.0
    q_mat = jnp.asarray(q_np, dtype=mm_dtype)

    # Pure view: (B, C, H, W) -> (B, C*Ho/r, r*s*W).
    x_view = x.reshape(B, C * Mc, K)

    out_tmp = pl.pallas_call(
        _reorg_kernel,
        out_shape=jax.ShapeDtypeStruct((B, planes, C * Mc, n_lanes), x.dtype),
        grid_spec=pltpu.PrefetchScalarGridSpec(
            num_scalar_prefetch=0,
            grid=(B // TB, C // TC),
            in_specs=[
                # Constant index_map: Q is fetched once and stays resident.
                pl.BlockSpec((K, N), lambda b, c: (0, 0)),
                pl.BlockSpec((TB, TC * Mc, K), lambda b, c: (b, c, 0)),
            ],
            out_specs=pl.BlockSpec((TB, planes, TC * Mc, n_lanes),
                                   lambda b, c: (b, 0, c, 0)),
        ),
        compiler_params=pltpu.CompilerParams(
            dimension_semantics=("parallel", "parallel"),
            vmem_limit_bytes=vmem_limit,
        ),
        cost_estimate=pl.CostEstimate(
            flops=int(2 * B * (C * Mc) * K * N),
            transcendentals=0,
            bytes_accessed=int(2 * B * C * H * W * itemsize
                               + K * N * mm_itemsize),
        ),
    )(q_mat, x_view)

    # Pure view: (B, s*s, C*Ho/r, r*Wo) -> (B, s*s*C, Ho, Wo)  (PyTorch layout).
    return out_tmp.reshape(B, planes * C, Ho, Wo)


def reorg_reference(x, stride=2):
    """Pure-JAX replica of the PyTorch view/transpose sequence."""
    B, C, H, W = x.shape
    s = stride
    x = x.reshape(B, C, H // s, s, W // s, s)
    x = jnp.transpose(x, (0, 1, 2, 4, 3, 5))          # .transpose(3, 4)
    x = x.reshape(B, C, (H // s) * (W // s), s * s)
    x = jnp.transpose(x, (0, 1, 3, 2))                 # .transpose(2, 3)
    x = x.reshape(B, C, s * s, H // s, W // s)
    x = jnp.transpose(x, (0, 2, 1, 3, 4))              # .transpose(1, 2)
    return x.reshape(B, s * s * C, H // s, W // s)


if __name__ == "__main__":
    key = jax.random.PRNGKey(0)
    B, C, H, W = 2, 4, 16, 16
    x = jax.random.normal(key, (B, C, H, W), dtype=jnp.float32)

    out = jax.block_until_ready(reorg_pallas(x, stride=2))
    ref = jax.block_until_ready(reorg_reference(x, stride=2))

    assert out.shape == (B, 4 * C, H // 2, W // 2), out.shape
    np.testing.assert_allclose(np.asarray(out), np.asarray(ref), rtol=0, atol=0)

    print("KERNEL_OK")
</pallas_src>

<mosaic_0001>
module attributes {stable_mosaic.version = 11 : i64} {
  func.func @_reorg_kernel(%arg0: i32, %arg1: i32, %arg2: memref<256x256xf32, #tpu.memory_space<vmem>>, %arg3: memref<1x4x256xf32, #tpu.memory_space<vmem>>, %arg4: memref<1x4x4x64xf32, #tpu.memory_space<vmem>>) attributes {dimension_semantics = [#tpu.dimension_semantics<parallel>, #tpu.dimension_semantics<parallel>], iteration_bounds = array<i64: 2, 1>, scalar_prefetch = 0 : i64, scratch_operands = 0 : i64, tpu.core_type = #tpu.core_type<tc>, window_params = [{pipeline_mode = #tpu.pipeline_mode<synchronous>, transform_indices = @transform_0, window_bounds = array<i64: 256, 256>}, {transform_indices = @transform_1, window_bounds = array<i64: 1, 4, 256>}, {transform_indices = @transform_2, window_bounds = array<i64: 1, 4, 4, 64>}]} {
    %c0 = arith.constant 0 : index
    %c0_0 = arith.constant 0 : index
    %0 = vector.load %arg2[%c0, %c0_0] : memref<256x256xf32, #tpu.memory_space<vmem>>, vector<256x256xf32>
    %c0_1 = arith.constant 0 : index
    %c0_2 = arith.constant 0 : index
    %c0_3 = arith.constant 0 : index
    %1 = vector.load %arg3[%c0_1, %c0_2, %c0_3] : memref<1x4x256xf32, #tpu.memory_space<vmem>>, vector<1x4x256xf32>
    %2 = vector.shape_cast %1 : vector<1x4x256xf32> to vector<4x256xf32>
    %cst = arith.constant dense<0.000000e+00> : vector<4x256xf32>
    %3 = tpu.matmul %2, %0, %cst {dimension_numbers = #tpu.dot_dimension_numbers<[1], [0], [0], [1], [0, 0, 1, 1], [], []>} : vector<4x256xf32>, vector<256x256xf32>, vector<4x256xf32> -> vector<4x256xf32>
    %4 = vector.extract_strided_slice %3 {offsets = [0, 0], sizes = [4, 64], strides = [1, 1]} : vector<4x256xf32> to vector<4x64xf32>
    %c0_4 = arith.constant 0 : index
    %c0_5 = arith.constant 0 : index
    %c0_6 = arith.constant 0 : index
    %c0_7 = arith.constant 0 : index
    %5 = vector.load %arg4[%c0_4, %c0_5, %c0_6, %c0_7] : memref<1x4x4x64xf32, #tpu.memory_space<vmem>>, vector<1x1x4x64xf32>
    %6 = vector.shape_cast %5 : vector<1x1x4x64xf32> to vector<4x64xf32>
    %7 = vector.shape_cast %4 : vector<4x64xf32> to vector<1x1x4x64xf32>
    tpu.vector_store %arg4[%c0_4, %c0_5, %c0_6, %c0_7], %7 {strides = array<i32>} : memref<1x4x4x64xf32, #tpu.memory_space<vmem>>, vector<1x1x4x64xf32>,
    %8 = vector.extract_strided_slice %3 {offsets = [0, 64], sizes = [4, 64], strides = [1, 1]} : vector<4x256xf32> to vector<4x64xf32>
    %c0_8 = arith.constant 0 : index
    %c1 = arith.constant 1 : index
    %c0_9 = arith.constant 0 : index
    %c0_10 = arith.constant 0 : index
    %9 = vector.load %arg4[%c0_8, %c1, %c0_9, %c0_10] : memref<1x4x4x64xf32, #tpu.memory_space<vmem>>, vector<1x1x4x64xf32>
    %10 = vector.shape_cast %9 : vector<1x1x4x64xf32> to vector<4x64xf32>
    %11 = vector.shape_cast %8 : vector<4x64xf32> to vector<1x1x4x64xf32>
    tpu.vector_store %arg4[%c0_8, %c1, %c0_9, %c0_10], %11 {strides = array<i32>} : memref<1x4x4x64xf32, #tpu.memory_space<vmem>>, vector<1x1x4x64xf32>,
    %12 = vector.extract_strided_slice %3 {offsets = [0, 128], sizes = [4, 64], strides = [1, 1]} : vector<4x256xf32> to vector<4x64xf32>
    %c0_11 = arith.constant 0 : index
    %c2 = arith.constant 2 : index
    %c0_12 = arith.constant 0 : index
    %c0_13 = arith.constant 0 : index
    %13 = vector.load %arg4[%c0_11, %c2, %c0_12, %c0_13] : memref<1x4x4x64xf32, #tpu.memory_space<vmem>>, vector<1x1x4x64xf32>
    %14 = vector.shape_cast %13 : vector<1x1x4x64xf32> to vector<4x64xf32>
    %15 = vector.shape_cast %12 : vector<4x64xf32> to vector<1x1x4x64xf32>
    tpu.vector_store %arg4[%c0_11, %c2, %c0_12, %c0_13], %15 {strides = array<i32>} : memref<1x4x4x64xf32, #tpu.memory_space<vmem>>, vector<1x1x4x64xf32>,
    %16 = vector.extract_strided_slice %3 {offsets = [0, 192], sizes = [4, 64], strides = [1, 1]} : vector<4x256xf32> to vector<4x64xf32>
    %c0_14 = arith.constant 0 : index
    %c3 = arith.constant 3 : index
    %c0_15 = arith.constant 0 : index
    %c0_16 = arith.constant 0 : index
    %17 = vector.load %arg4[%c0_14, %c3, %c0_15, %c0_16] : memref<1x4x4x64xf32, #tpu.memory_space<vmem>>, vector<1x1x4x64xf32>
    %18 = vector.shape_cast %17 : vector<1x1x4x64xf32> to vector<4x64xf32>
    %19 = vector.shape_cast %16 : vector<4x64xf32> to vector<1x1x4x64xf32>
    tpu.vector_store %arg4[%c0_14, %c3, %c0_15, %c0_16], %19 {strides = array<i32>} : memref<1x4x4x64xf32, #tpu.memory_space<vmem>>, vector<1x1x4x64xf32>,
    return
  }
  func.func @transform_0(%arg0: i32, %arg1: i32) -> (i32, i32) {
    %c0_i32 = arith.constant 0 : i32
    %c0_i32_0 = arith.constant 0 : i32
    %c0_i32_1 = arith.constant 0 : i32
    return %c0_i32, %c0_i32_0 : i32, i32
  }
  func.func @transform_1(%arg0: i32, %arg1: i32) -> (i32, i32, i32) {
    %c0_i32 = arith.constant 0 : i32
    %c0_i32_0 = arith.constant 0 : i32
    return %arg0, %arg1, %c0_i32 : i32, i32, i32
  }
  func.func @transform_2(%arg0: i32, %arg1: i32) -> (i32, i32, i32, i32) {
    %c0_i32 = arith.constant 0 : i32
    %c0_i32_0 = arith.constant 0 : i32
    %c0_i32_1 = arith.constant 0 : i32
    return %arg0, %c0_i32, %arg1, %c0_i32_0 : i32, i32, i32, i32
  }
}

</mosaic_0001>

<llo_original>
// kernel: tpu_custom_call.1
$region0: #{tpu_custom_call.1}
  #allocation0 [shape = 'u32[]', space=smem, size = 0x4, offset = 0x4, fixed_abs, tag = 'smem constant byte address 0x4 - core index']
  #allocation1 [shape = 'u32[72,128]{1,0:T(1,128)}', space=vmem, size = 0x9000, scoped, tag = 'internal scratch']
  %s0 = inlined_call_operand.hbm [shape: f32[256,256], index: 0, kind: input, shape index: {}]
  %s1 = inlined_call_operand.hbm [shape: f32[2,4,256], index: 1, kind: input, shape index: {}]
  %s2 = inlined_call_operand.hbm [shape: f32[2,4,4,64], index: 2, kind: output, shape index: {}]
  %s3 = sld [smem:[#allocation0]]
  $region49: #{tpu_custom_call.1} parent=0
    _
  %s5 = ssub.s32 1, %s3
  %s6 = scalar_select 0, %s5, %s3
  $region1: #{tpu_custom_call.1} parent=0
    #allocation2 [shape = 'u8[262144]{0}', space=vmem, size = 0x40000, scoped, tag = 'input window, operand 0, single buffered']
    #allocation3 [shape = 's32[2]{0}', space=sflag, size = 0x8, scoped, tag = 'scoped memory for tpu_custom_call.1']
    #allocation4 [shape = 's32[2]{0}', space=sflag, size = 0x8, scoped, tag = 'scoped memory for tpu_custom_call.1']
    #allocation5 [shape = 'u8[8192]{0}', space=vmem, size = 0x2000, scoped, tag = 'input window, operand 1']
    #allocation6 [shape = 's32[2]{0}', space=sflag, size = 0x8, scoped, tag = 'scoped memory for tpu_custom_call.1']
    #allocation7 [shape = 'u8[16384]{0}', space=vmem, size = 0x4000, scoped, tag = 'output window, operand 0']
    %7 = vsyncpa [#allocation3], 0
    %8 = vsyncpa [#allocation6], 0
    %s9 = scalar_lea.sflag [#allocation6], 1
    %10 = vsyncpa %s9, 0
    %11 = vsyncpa [#allocation4], 0
    %s12 = scalar_lea.sflag [#allocation4], 1
    %13 = vsyncpa %s12, 0
    loop: start=0, step=1, limit=4
    $region2: #{tpu_custom_call.1} parent=1 // loop_pre_header
      _
    $region3: #{tpu_custom_call.1} parent=1 // loop_header
      %s15 = sphi 0, %s19
      %p16 = scmp.ge.s32.totalorder %s15, 4
      %s22 = sphi 0, %s34
      %s23 = sphi 0, %s30
      %s24 = sphi 0, %s22
      %s25 = sphi 0, %s23
      %s26 = sphi 0, %s24
      %s27 = sphi 0, %s25
      %s35 = sphi 0, %s35
      %s37 = sphi 0, %s35
      %s38 = sphi 0, %s37
      %s52 = sphi 0, %s38
      %s60 = sphi 0, %s62
      %s63 = sphi 0, %s60
      %s64 = sphi 0, %s63
      %s80 = sphi 0, %s64
      %s88 = sphi 0, %s90
      %s91 = sphi 0, %s88
      %s92 = sphi 0, %s91
      %s108 = sphi 0, %s92
    $region4: #{tpu_custom_call.1} parent=1 // loop_header_branch
      %18 = sbr.rel (%p16) target = $region8
    $region5: #{tpu_custom_call.1} parent=1 // loop_body
      %s20 = ssub.s32 %s15, 1
      %s21 = ssub.s32 %s15, 2
      %s28 = sadd.s32 1, %s23
      %p29 = scmp.ge.s32.totalorder %s28, 1
      %s30 = scalar_select %p29, 0, %s28
      %s31 = sadd.s32 1, %s22
      %s32 = scalar_select %p29, %s31, %s22
      %p33 = scmp.ge.s32.totalorder %s32, 2
      %s34 = scalar_select %p33, 0, %s32
      %s36 = sadd.s32 %s35, 1
      %p39 = scmp.eq.s32.totalorder %s15, 1
      %p40 = scmp.ne.s32.totalorder %s35, %s37
      %p41 = scmp.eq.s32.totalorder %s15, 0
      %p42 = por %p40, %p41
      %p43 = scmp.ne.s32.totalorder %s35, %s37
      %p44 = scmp.eq.s32.totalorder %s20, 1
      %p45 = por %p43, %p44
      %p46 = scmp.ne.s32.totalorder %s37, %s38
      %p47 = scmp.eq.s32.totalorder %s20, 0
      %p48 = por %p46, %p47
      %p49 = scmp.ne.s32.totalorder %s37, %s38
      %p50 = scmp.eq.s32.totalorder %s21, 1
      %p51 = por %p49, %p50
      %p53 = scmp.ne.s32.totalorder %s38, %s52
      %p54 = scmp.eq.s32.totalorder %s21, 0
      %p55 = por %p53, %p54
      %s56 = ssub.s32 %s22, %s34
      %s57 = ssub.s32 %s23, %s30
      %s58 = sor.u32 %s56, %s57
      %p59 = scmp.eq.s32.totalorder %s58, 0
      %s61 = sadd.s32 %s60, 1
      %s62 = scalar_select %p59, %s60, %s61
      %p65 = pneg %p59
      %p66 = scmp.eq.s32.totalorder %s15, 1
      %p67 = por %p65, %p66
      %p68 = scmp.ne.s32.totalorder %s60, %s63
      %p69 = scmp.eq.s32.totalorder %s15, 0
      %p70 = por %p68, %p69
      %p71 = scmp.ne.s32.totalorder %s60, %s63
      %p72 = scmp.eq.s32.totalorder %s20, 1
      %p73 = por %p71, %p72
      %p74 = scmp.ne.s32.totalorder %s63, %s64
      %p75 = scmp.eq.s32.totalorder %s20, 0
      %p76 = por %p74, %p75
      %p77 = scmp.ne.s32.totalorder %s63, %s64
      %p78 = scmp.eq.s32.totalorder %s21, 1
      %p79 = por %p77, %p78
      %p81 = scmp.ne.s32.totalorder %s64, %s80
      %p82 = scmp.eq.s32.totalorder %s21, 0
      %p83 = por %p81, %p82
      %s84 = ssub.s32 %s22, %s34
      %s85 = ssub.s32 %s23, %s30
      %s86 = sor.u32 %s84, %s85
      %p87 = scmp.eq.s32.totalorder %s86, 0
      %s89 = sadd.s32 %s88, 1
      %s90 = scalar_select %p87, %s88, %s89
      %p93 = pneg %p87
      %p94 = scmp.eq.s32.totalorder %s15, 1
      %p95 = por %p93, %p94
      %p96 = scmp.ne.s32.totalorder %s88, %s91
      %p97 = scmp.eq.s32.totalorder %s15, 0
      %p98 = por %p96, %p97
      %p99 = scmp.ne.s32.totalorder %s88, %s91
      %p100 = scmp.eq.s32.totalorder %s20, 1
      %p101 = por %p99, %p100
      %p102 = scmp.ne.s32.totalorder %s91, %s92
      %p103 = scmp.eq.s32.totalorder %s20, 0
      %p104 = por %p102, %p103
      %p105 = scmp.ne.s32.totalorder %s91, %s92
      %p106 = scmp.eq.s32.totalorder %s21, 1
      %p107 = por %p105, %p106
      %p109 = scmp.ne.s32.totalorder %s92, %s108
      %p110 = scmp.eq.s32.totalorder %s21, 0
      %p111 = por %p109, %p110
      %p112 = scmp.le.s32.totalorder 1, %s15
      %p113 = scmp.lt.s32.totalorder %s15, 3
      %p114 = pnand %p112, %p113
      %p115 = pneg %p114
      // Predicated region
      $region9: #{tpu_custom_call.1} parent=5 // pred_check
        _
      $region10: #{tpu_custom_call.1} parent=5 // pred_check_branch
        %117 = sbr.rel (%p114) target = $region12
      $region11: #{tpu_custom_call.1} parent=5 // pred_region
        %s118 = ssub.s32 %s15, 1
        // Predicated region
        $region13: #{tpu_custom_call.1} parent=11 // pred_check
          %p119 = pneg %p48
        $region14: #{tpu_custom_call.1} parent=11 // pred_check_branch
          %121 = sbr.rel (%p119) target = $region16
        $region15: #{tpu_custom_call.1} parent=11 // pred_region
          %123 = vsyncadd [#allocation3], 0
          %s124 = sshll.u32 %s0, 4
          %s125 = int_to_ptr.hbm [resolvable:$true] %s124
          %s126 = sshll.u32 [#allocation2], 4
          %s127 = int_to_ptr.vmem [resolvable:$true] %s126
          %132 = dma.hbm_to_vmem [thread:$0]  %s125, 8192, %s127, [#allocation3], 256, 256, 16
        $region16: #{tpu_custom_call.1} parent=11 // pred_fallthru
          _
      $region12: #{tpu_custom_call.1} parent=5 // pred_fallthru
        _
      %p133 = scmp.lt.s32.totalorder %s15, 2
      // Predicated region
      $region17: #{tpu_custom_call.1} parent=5 // pred_check
        %p134 = pneg %p133
      $region18: #{tpu_custom_call.1} parent=5 // pred_check_branch
        %136 = sbr.rel (%p134) target = $region20
      $region19: #{tpu_custom_call.1} parent=5 // pred_region
        // Predicated region
        $region21: #{tpu_custom_call.1} parent=19 // pred_check
          %p137 = pneg %p70
        $region22: #{tpu_custom_call.1} parent=19 // pred_check_branch
          %139 = sbr.rel (%p137) target = $region24
        $region23: #{tpu_custom_call.1} parent=19 // pred_region
          %s140 = sand.u32 %s60, 1
          %s141 = scalar_lea.sflag [#allocation6], %s140
          %s142 = sand.u32 %s60, 1
          %s143 = smul.addr %s142, 8
          %s144 = scalar_lea.vmem [#allocation5], %s143
          %146 = vsyncadd %s141, 0
          %s147 = smul.addr %s23, 2
          %s148 = smul.addr %s22, 2
          %s149 = sadd.s32 %s147, %s148
          %s150 = smul.addr %s149, 4
          %s151 = scalar_lea.hbm %s1, %s150
          %s153 = sshll.u32 %s151, 4
          %s154 = int_to_ptr.hbm [resolvable:$true] %s153
          %s155 = sshll.u32 %s144, 4
          %s156 = int_to_ptr.vmem [resolvable:$true] %s155
          %158 = dma.hbm_to_vmem [thread:$0]  %s154, 128, %s156, %s141
        $region24: #{tpu_custom_call.1} parent=19 // pred_fallthru
          _
      $region20: #{tpu_custom_call.1} parent=5 // pred_fallthru
        _
      %p159 = scmp.le.s32.totalorder 1, %s15
      %p160 = scmp.lt.s32.totalorder %s15, 3
      %p161 = pnand %p159, %p160
      %p162 = pneg %p161
      // Predicated region
      $region25: #{tpu_custom_call.1} parent=5 // pred_check
        _
      $region26: #{tpu_custom_call.1} parent=5 // pred_check_branch
        %164 = sbr.rel (%p161) target = $region28
      $region27: #{tpu_custom_call.1} parent=5 // pred_region
        %s165 = ssub.s32 %s15, 1
        // Predicated region
        $region29: #{tpu_custom_call.1} parent=27 // pred_check
          %p166 = pneg %p48
        $region30: #{tpu_custom_call.1} parent=27 // pred_check_branch
          %168 = sbr.rel (%p166) target = $region32
        $region31: #{tpu_custom_call.1} parent=27 // pred_region
          %170 = dma.done [#allocation3], 8192
        $region32: #{tpu_custom_call.1} parent=27 // pred_fallthru
          _
        %s171 = sand.u32 %s63, 1
        %s172 = scalar_lea.sflag [#allocation6], %s171
        %s173 = sand.u32 %s63, 1
        %s174 = smul.addr %s173, 8
        %s175 = scalar_lea.vmem [#allocation5], %s174
        // Predicated region
        $region33: #{tpu_custom_call.1} parent=27 // pred_check
          %p176 = pneg %p76
        $region34: #{tpu_custom_call.1} parent=27 // pred_check_branch
          %178 = sbr.rel (%p176) target = $region36
        $region35: #{tpu_custom_call.1} parent=27 // pred_region
          %180 = dma.done %s172, 128
        $region36: #{tpu_custom_call.1} parent=27 // pred_fallthru
          _
        %p181 = pneg %p48
        %p182 = pneg %p45
        %s183 = sand.u32 %s63, 1
        %s184 = scalar_lea.sflag [#allocation6], %s183
        %s185 = sand.u32 %s63, 1
        %s186 = smul.addr %s185, 8
        %s187 = scalar_lea.vmem [#allocation5], %s186
        %p188 = pneg %p76
        %p189 = pneg %p73
        %p190 = pneg %p104
        %p191 = pneg %p101
        %s192 = sand.u32 %s91, 1
        %s193 = scalar_lea.sflag [#allocation4], %s192
        %s194 = sand.u32 %s91, 1
        %s195 = smul.addr %s194, 16
        %s196 = scalar_lea.vmem [#allocation7], %s195
        %v197 = vld [vmem:[#allocation2] sm:$0xff]
        %v198 = vld [vmem:[#allocation2 + $0x8] sm:$0xff]
        %v199 = vld [vmem:[#allocation2 + $0x10] sm:$0xff]
        %v200 = vld [vmem:[#allocation2 + $0x18] sm:$0xff]
        %v201 = vld [vmem:[#allocation2 + $0x20] sm:$0xff]
        %v202 = vld [vmem:[#allocation2 + $0x28] sm:$0xff]
        %v203 = vld [vmem:[#allocation2 + $0x30] sm:$0xff]
        %v204 = vld [vmem:[#allocation2 + $0x38] sm:$0xff]
        %v205 = vld [vmem:[#allocation2 + $0x40] sm:$0xff]
        %v206 = vld [vmem:[#allocation2 + $0x48] sm:$0xff]
        %v207 = vld [vmem:[#allocation2 + $0x50] sm:$0xff]
        %v208 = vld [vmem:[#allocation2 + $0x58] sm:$0xff]
        %v209 = vld [vmem:[#allocation2 + $0x60] sm:$0xff]
        %v210 = vld [vmem:[#allocation2 + $0x68] sm:$0xff]
        %v211 = vld [vmem:[#allocation2 + $0x70] sm:$0xff]
        %v212 = vld [vmem:[#allocation2 + $0x78] sm:$0xff]
        %v213 = vld [vmem:[#allocation2 + $0x80] sm:$0xff]
        %v214 = vld [vmem:[#allocation2 + $0x88] sm:$0xff]
        %v215 = vld [vmem:[#allocation2 + $0x90] sm:$0xff]
        %v216 = vld [vmem:[#allocation2 + $0x98] sm:$0xff]
        %v217 = vld [vmem:[#allocation2 + $0xa0] sm:$0xff]
        %v218 = vld [vmem:[#allocation2 + $0xa8] sm:$0xff]
        %v219 = vld [vmem:[#allocation2 + $0xb0] sm:$0xff]
        %v220 = vld [vmem:[#allocation2 + $0xb8] sm:$0xff]
        %v221 = vld [vmem:[#allocation2 + $0xc0] sm:$0xff]
        %v222 = vld [vmem:[#allocation2 + $0xc8] sm:$0xff]
        %v223 = vld [vmem:[#allocation2 + $0xd0] sm:$0xff]
        %v224 = vld [vmem:[#allocation2 + $0xd8] sm:$0xff]
        %v225 = vld [vmem:[#allocation2 + $0xe0] sm:$0xff]
        %v226 = vld [vmem:[#allocation2 + $0xe8] sm:$0xff]
        %v227 = vld [vmem:[#allocation2 + $0xf0] sm:$0xff]
        %v228 = vld [vmem:[#allocation2 + $0xf8] sm:$0xff]
        %v229 = vld [vmem:[#allocation2 + $0x100] sm:$0xff]
        %v230 = vld [vmem:[#allocation2 + $0x108] sm:$0xff]
        %v231 = vld [vmem:[#allocation2 + $0x110] sm:$0xff]
        %v232 = vld [vmem:[#allocation2 + $0x118] sm:$0xff]
        %v233 = vld [vmem:[#allocation2 + $0x120] sm:$0xff]
        %v234 = vld [vmem:[#allocation2 + $0x128] sm:$0xff]
        %v235 = vld [vmem:[#allocation2 + $0x130] sm:$0xff]
        %v236 = vld [vmem:[#allocation2 + $0x138] sm:$0xff]
        %v237 = vld [vmem:[#allocation2 + $0x140] sm:$0xff]
        %v238 = vld [vmem:[#allocation2 + $0x148] sm:$0xff]
        %v239 = vld [vmem:[#allocation2 + $0x150] sm:$0xff]
        %v240 = vld [vmem:[#allocation2 + $0x158] sm:$0xff]
        %v241 = vld [vmem:[#allocation2 + $0x160] sm:$0xff]
        %v242 = vld [vmem:[#allocation2 + $0x168] sm:$0xff]
        %v243 = vld [vmem:[#allocation2 + $0x170] sm:$0xff]
        %v244 = vld [vmem:[#allocation2 + $0x178] sm:$0xff]
        %v245 = vld [vmem:[#allocation2 + $0x180] sm:$0xff]
        %v246 = vld [vmem:[#allocation2 + $0x188] sm:$0xff]
        %v247 = vld [vmem:[#allocation2 + $0x190] sm:$0xff]
        %v248 = vld [vmem:[#allocation2 + $0x198] sm:$0xff]
        %v249 = vld [vmem:[#allocation2 + $0x1a0] sm:$0xff]
        %v250 = vld [vmem:[#allocation2 + $0x1a8] sm:$0xff]
        %v251 = vld [vmem:[#allocation2 + $0x1b0] sm:$0xff]
        %v252 = vld [vmem:[#allocation2 + $0x1b8] sm:$0xff]
        %v253 = vld [vmem:[#allocation2 + $0x1c0] sm:$0xff]
        %v254 = vld [vmem:[#allocation2 + $0x1c8] sm:$0xff]
        %v255 = vld [vmem:[#allocation2 + $0x1d0] sm:$0xff]
        %v256 = vld [vmem:[#allocation2 + $0x1d8] sm:$0xff]
        %v257 = vld [vmem:[#allocation2 + $0x1e0] sm:$0xff]
        %v258 = vld [vmem:[#allocation2 + $0x1e8] sm:$0xff]
        %v259 = vld [vmem:[#allocation2 + $0x1f0] sm:$0xff]
        %v260 = vld [vmem:[#allocation2 + $0x1f8] sm:$0xff]
        %v261 = vld [vmem:[%s175] sm:$0xff]
        %263 = vst [vmem:[#allocation1] ss:$2 sm:$0xff] %v261
        %v264 = vld.sshfl [vmem:[#allocation1] sm:$0xff pattern:$0x75316420]
        %v265 = vld.sshfl [vmem:[#allocation1 + $0x8] sm:$0xff pattern:$0x75316420]
        %268 = vmatpush.msra.mxu0 %v227
        %269 = vmatpush.msra.mxu0 %v225
        %270 = vmatpush.msra.mxu0 %v223
        %271 = vmatpush.msra.mxu0 %v221
        %272 = vmatpush.msra.mxu0 %v219
        %273 = vmatpush.msra.mxu0 %v217
        %274 = vmatpush.msra.mxu0 %v215
        %275 = vmatpush.msra.mxu0 %v213
        %276 = vmatpush.msra.mxu0 %v211
        %277 = vmatpush.msra.mxu0 %v209
        %278 = vmatpush.msra.mxu0 %v207
        %279 = vmatpush.msra.mxu0 %v205
        %280 = vmatpush.msra.mxu0 %v203
        %281 = vmatpush.msra.mxu0 %v201
        %282 = vmatpush.msra.mxu0 %v199
        %283 = vmatpush.msra.mxu0 %v197
        %284 = vmatmul.f32.gmra.mxu0 %v264
        %v285 = vpop.f32.mrf.mxu0
        %v286 = vadd.f32 0.0, %v285
        %287 = vdwg.mxu0
        %288 = vmatpush.msra.mxu0 %v259
        %289 = vmatpush.msra.mxu0 %v257
        %290 = vmatpush.msra.mxu0 %v255
        %291 = vmatpush.msra.mxu0 %v253
        %292 = vmatpush.msra.mxu0 %v251
        %293 = vmatpush.msra.mxu0 %v249
        %294 = vmatpush.msra.mxu0 %v247
        %295 = vmatpush.msra.mxu0 %v245
        %296 = vmatpush.msra.mxu0 %v243
        %297 = vmatpush.msra.mxu0 %v241
        %298 = vmatpush.msra.mxu0 %v239
        %299 = vmatpush.msra.mxu0 %v237
        %300 = vmatpush.msra.mxu0 %v235
        %301 = vmatpush.msra.mxu0 %v233
        %302 = vmatpush.msra.mxu0 %v231
        %303 = vmatpush.msra.mxu0 %v229
        %304 = vmatmul.f32.gmra.mxu0 %v265
        %v305 = vpop.f32.mrf.mxu0
        %v306 = vadd.f32 %v286, %v305
        %307 = vdwg.mxu0
        %308 = vmatpush.msra.mxu0 %v228
        %309 = vmatpush.msra.mxu0 %v226
        %310 = vmatpush.msra.mxu0 %v224
        %311 = vmatpush.msra.mxu0 %v222
        %312 = vmatpush.msra.mxu0 %v220
        %313 = vmatpush.msra.mxu0 %v218
        %314 = vmatpush.msra.mxu0 %v216
        %315 = vmatpush.msra.mxu0 %v214
        %316 = vmatpush.msra.mxu0 %v212
        %317 = vmatpush.msra.mxu0 %v210
        %318 = vmatpush.msra.mxu0 %v208
        %319 = vmatpush.msra.mxu0 %v206
        %320 = vmatpush.msra.mxu0 %v204
        %321 = vmatpush.msra.mxu0 %v202
        %322 = vmatpush.msra.mxu0 %v200
        %323 = vmatpush.msra.mxu0 %v198
        %324 = vmatmul.f32.gmra.mxu0 %v264
        %v325 = vpop.f32.mrf.mxu0
        %v326 = vadd.f32 0.0, %v325
        %327 = vdwg.mxu0
        %328 = vmatpush.msra.mxu0 %v260
        %329 = vmatpush.msra.mxu0 %v258
        %330 = vmatpush.msra.mxu0 %v256
        %331 = vmatpush.msra.mxu0 %v254
        %332 = vmatpush.msra.mxu0 %v252
        %333 = vmatpush.msra.mxu0 %v250
        %334 = vmatpush.msra.mxu0 %v248
        %335 = vmatpush.msra.mxu0 %v246
        %336 = vmatpush.msra.mxu0 %v244
        %337 = vmatpush.msra.mxu0 %v242
        %338 = vmatpush.msra.mxu0 %v240
        %339 = vmatpush.msra.mxu0 %v238
        %340 = vmatpush.msra.mxu0 %v236
        %341 = vmatpush.msra.mxu0 %v234
        %342 = vmatpush.msra.mxu0 %v232
        %343 = vmatpush.msra.mxu0 %v230
        %344 = vmatmul.f32.gmra.mxu0 %v265
        %v345 = vpop.f32.mrf.mxu0
        %v346 = vadd.f32 %v326, %v345
        %347 = vdwg.mxu0
        %vm348 = vcmask 519168
        %349 = vst.msk [vmem:[%s196] sm:$0xf] %vm348, %v306
        %351 = vrot.lane.b32.xlu0 %v306, 64
        %v352 = vpop.permute.xlu0 %351
        %s354 = scalar_lea.vmem %s196, 4 [#allocation7]
        %355 = vst.msk [vmem:[%s354] sm:$0xf] %vm348, %v352
        %s356 = scalar_lea.vmem %s196, 8 [#allocation7]
        %357 = vst.msk [vmem:[%s356] sm:$0xf] %vm348, %v346
        %359 = vrot.lane.b32.xlu0 %v346, 64
        %v360 = vpop.permute.xlu0 %359
        %s362 = scalar_lea.vmem %s196, 12 [#allocation7]
        %363 = vst.msk [vmem:[%s362] sm:$0xf] %vm348, %v360
        %s364 = sand.u32 %s91, 1
        %s365 = scalar_lea.sflag [#allocation4], %s364
        %s366 = sand.u32 %s91, 1
        %s367 = smul.addr %s366, 16
        %s368 = scalar_lea.vmem [#allocation7], %s367
        // Predicated region
        $region37: #{tpu_custom_call.1} parent=27 // pred_check
          %p369 = pneg %p101
        $region38: #{tpu_custom_call.1} parent=27 // pred_check_branch
          %371 = sbr.rel (%p369) target = $region40
        $region39: #{tpu_custom_call.1} parent=27 // pred_region
          %373 = vsyncadd %s365, 0
          %s374 = smul.addr %s24, 4
          %s375 = sadd.s32 %s25, %s374
          %s376 = smul.addr %s375, 4
          %s377 = scalar_lea.hbm %s2, %s376
          %s378 = sshll.u32 %s368, 4
          %s379 = int_to_ptr.vmem [resolvable:$true] %s378
          %s380 = sshll.u32 %s377, 4
          %s381 = int_to_ptr.hbm [resolvable:$true] %s380
          %386 = dma.vmem_to_hbm [thread:$0]  %s379, 256, %s381, %s365, 64, 64, 4
        $region40: #{tpu_custom_call.1} parent=27 // pred_fallthru
          _
      $region28: #{tpu_custom_call.1} parent=5 // pred_fallthru
        _
      %p387 = scmp.le.s32.totalorder 2, %s15
      // Predicated region
      $region41: #{tpu_custom_call.1} parent=5 // pred_check
        %p388 = pneg %p387
      $region42: #{tpu_custom_call.1} parent=5 // pred_check_branch
        %390 = sbr.rel (%p388) target = $region44
      $region43: #{tpu_custom_call.1} parent=5 // pred_region
        %s391 = ssub.s32 %s15, 2
        // Predicated region
        $region45: #{tpu_custom_call.1} parent=43 // pred_check
          %p392 = pneg %p107
        $region46: #{tpu_custom_call.1} parent=43 // pred_check_branch
          %394 = sbr.rel (%p392) target = $region48
        $region47: #{tpu_custom_call.1} parent=43 // pred_region
          %s395 = sand.u32 %s92, 1
          %s396 = scalar_lea.sflag [#allocation4], %s395
          %s397 = sand.u32 %s92, 1
          %s398 = smul.addr %s397, 16
          %s399 = scalar_lea.vmem [#allocation7], %s398
          %401 = dma.done %s396, 256
        $region48: #{tpu_custom_call.1} parent=43 // pred_fallthru
          _
      $region44: #{tpu_custom_call.1} parent=5 // pred_fallthru
        _
    $region6: #{tpu_custom_call.1} parent=1 // loop_footer
      %s19 = sadd.s32 1, %s15
    $region7: #{tpu_custom_call.1} parent=1 // loop_footer_branch
      %14 = sbr.rel target = $region3
    $region8: #{tpu_custom_call.1} parent=1 // loop_exit
      _
    %402 = vsyncpa [#allocation3], 1
    %s403 = scalar_lea.sflag [#allocation3], 1
    %404 = vsyncpa %s403, 1
    %405 = vsyncpa [#allocation6], 1
    %s406 = scalar_lea.sflag [#allocation6], 1
    %407 = vsyncpa %s406, 1
    %408 = vsyncpa [#allocation4], 1
    %s409 = scalar_lea.sflag [#allocation4], 1
    %410 = vsyncpa %s409, 1

</llo_original>
